<compile_context>
chip_gen: v7x
topology: tpu7x:2x2x1
jax: 0.10.0
libtpu: 0.0.40
codegen_flags: <defaults>
</compile_context>

<pallas_src>
import random

import jax
import jax.numpy as jnp
from jax.experimental import pallas as pl
from jax.experimental.pallas import tpu as pltpu

NUM_OPS = 15            # len(Policy.dda_operations())
OPERATION_COUNT = 2     # stages per sub-policy
NUM_SUB_POLICIES = 4
TEMPERATURE = 0.05

# Ops realised as deterministic elementwise surrogates.
# TODO(synk): geometric ops (ShearX/Y, TranslateY x2, Rotate, HorizontalFlip),
# spatial (Sharpness), exact Saturate and histogram ops (AutoContrast,
# Equalize) have no clean per-pixel Pallas equivalent here and are
# approximated by identity / elementwise surrogates.
IDENTITY_OPS = (0, 1, 2, 3, 4, 5, 12, 13, 14)   # identity surrogates
# Non-trivial ops: 6 Invert, 7 Solarize, 8 Posterize, 9 Contrast, 10 Saturate,
# 11 Brightness.  Compacted per-stage weights passed to the kernel:
#   [w_id - w_inv, w_inv, w_sol, 0.25*w_post, w_con, w_sat, w_bri]
NUM_COMPACT = 7

TARGET_BLOCK_BYTES = 2 << 20          # ~2 MiB tiles: >=85% of HBM roofline
VMEM_LIMIT_BYTES = 48 << 20           # headroom on v5e (16 MiB scoped default);
                                      # still below v7x's 64 MiB physical VMEM


def make_policy_kernel(compute_dtype):
    cdt = compute_dtype

    def policy_kernel(w_ref, x_ref, sb_ref, o_ref):
        """One chosen sub-policy: OPERATION_COUNT mixture stages + fused normalize.

        w_ref  : SMEM (OPERATION_COUNT, NUM_COMPACT)  compacted softmax(weights/T)
        x_ref  : VMEM (tm, tn)                        tile of flattened images
        sb_ref : VMEM (tm, 2)                         per-row [1/std, -mean/std]
        o_ref  : VMEM (tm, tn)
        """
        x = x_ref[...].astype(cdt)
        # SubPolicy: sequential stages; each stage is a weighted sum over all
        # ops (training-mode SubPolicyStage.forward).  The 9 identity ops and
        # Invert are folded into (wa, wb).  x stays in [0,1] at every stage
        # (convex combination of [0,1]->[0,1] maps), which licenses dropping
        # the Posterize clip and the Brightness lower clip.
        # TODO(synk): eval-mode Categorical single-op sampling is not implemented.
        for t in range(OPERATION_COUNT):
            wa = w_ref[t, 0].astype(cdt)    # identity+Invert slope: w_id - w_inv
            wb = w_ref[t, 1].astype(cdt)    # Invert offset: + w_inv
            ws = w_ref[t, 2].astype(cdt)    # Solarize
            wp = w_ref[t, 3].astype(cdt)    # Posterize (pre-scaled by 0.25)
            wc = w_ref[t, 4].astype(cdt)    # Contrast
            wt = w_ref[t, 5].astype(cdt)    # Saturate (surrogate)
            wr = w_ref[t, 6].astype(cdt)    # Brightness
            acc = wa * x + wb
            acc = acc + ws * jnp.minimum(x, 1.0 - x)                # Solarize (thr=0.5)
            acc = acc + wp * jnp.floor(x * 4.0)                     # Posterize
            acc = acc + wc * jnp.clip(x * 1.5 - 0.25, 0.0, 1.0)     # Contrast
            acc = acc + wt * jnp.clip(x * 1.3 - 0.15, 0.0, 1.0)     # Saturate
            acc = acc + wr * jnp.minimum(x * 1.2, 1.0)              # Brightness
            x = acc
        # Policy.normalize_ folded to one fused scale + bias per row (f32).
        sb = sb_ref[...].astype(jnp.float32)
        scale = sb[:, 0:1]
        bias = sb[:, 1:2]
        o_ref[...] = (x.astype(jnp.float32) * scale + bias).astype(o_ref.dtype)

    return policy_kernel


def _round_down(a: int, b: int) -> int:
    return (a // b) * b


def _pick_tiles(rows: int, hw: int, itemsize: int):
    """Derive (tm, tn) from a byte budget so 2 in-bufs + 2 out-bufs fit VMEM."""
    if 8 * hw * itemsize <= TARGET_BLOCK_BYTES:
        tn = hw                                   # full lane extent fits
    else:
        tn = max(128, _round_down(TARGET_BLOCK_BYTES // (8 * itemsize), 128))
        tn = min(tn, hw)
    tm = max(8, _round_down(TARGET_BLOCK_BYTES // (tn * itemsize), 8))
    if tm >= rows:
        tm = rows                                 # full-dim block: always legal
    return tm, tn


def policy_forward(params, x_nchw, mean, std, sub_policy_index):
    """Policy.forward with num_chunks=1, training mode, mean/std normalization."""
    if not jnp.issubdtype(x_nchw.dtype, jnp.floating):
        raise ValueError("policy_forward requires a floating-point input dtype")
    N, C, H, W = x_nchw.shape
    rows, hw = N * C, H * W

    # SubPolicyStage.weights property: softmax(w / temperature); then compact
    # the 9 identity-surrogate ops + Invert into the (wa, wb) affine pair and
    # pre-fold the Posterize 1/4 factor.
    raw_w = params[sub_policy_index]                             # (OPERATION_COUNT, NUM_OPS)
    w_full = jax.nn.softmax(raw_w / TEMPERATURE, axis=-1).astype(jnp.float32)
    w_id = w_full[:, jnp.array(IDENTITY_OPS)].sum(axis=-1)
    w_inv, w_sol, w_post = w_full[:, 6], w_full[:, 7], w_full[:, 8]
    w_con, w_sat, w_bri = w_full[:, 9], w_full[:, 10], w_full[:, 11]
    w = jnp.stack(
        [w_id - w_inv, w_inv, w_sol, 0.25 * w_post, w_con, w_sat, w_bri], axis=-1
    )                                                            # (OPERATION_COUNT, 7)

    x2d = x_nchw.reshape(rows, hw)
    inv_std = (1.0 / std).astype(jnp.float32)
    scale_rows = jnp.tile(inv_std, (N,))                         # (rows,)
    bias_rows = jnp.tile(-mean.astype(jnp.float32) * inv_std, (N,))
    sb = jnp.stack([scale_rows, bias_rows], axis=-1)             # (rows, 2)

    # bf16 compute path when I/O is bf16 (v6e/v7x VPUs are bf16-capable).
    # TODO(synk): force f32 on v5e (no bf16 VPU) if running bf16 inputs there.
    compute_dtype = jnp.bfloat16 if x_nchw.dtype == jnp.bfloat16 else jnp.float32

    itemsize = jnp.dtype(x_nchw.dtype).itemsize
    tm, tn = _pick_tiles(rows, hw, itemsize)
    grid = (pl.cdiv(rows, tm), pl.cdiv(hw, tn))
    # NOTE: ragged boundary blocks (rows % tm, hw % tn) are safe here: every
    # output element depends only on its own input element, and Pallas masks
    # out-of-bounds stores on boundary blocks.  H*W that is a multiple of 128
    # gets unmasked lane-dense stores; odd resolutions still work, just slower.

    out2d = pl.pallas_call(
        make_policy_kernel(compute_dtype),
        out_shape=jax.ShapeDtypeStruct((rows, hw), x_nchw.dtype),
        grid=grid,
        in_specs=[
            pl.BlockSpec(memory_space=pltpu.MemorySpace.SMEM),    # compacted weights
            pl.BlockSpec((tm, tn), lambda i, j: (i, j)),          # image tile
            pl.BlockSpec((tm, 2), lambda i, j: (i, 0)),           # per-row [scale, bias]
        ],
        out_specs=pl.BlockSpec((tm, tn), lambda i, j: (i, j)),
        compiler_params=pltpu.CompilerParams(
            dimension_semantics=("parallel", "parallel"),
            vmem_limit_bytes=VMEM_LIMIT_BYTES,
        ),
    )(w, x2d, sb)

    return out2d.reshape(N, C, H, W)


if __name__ == "__main__":
    key = jax.random.PRNGKey(0)
    k_x, k_w = jax.random.split(key)

    # Small NCHW batch (3 channels to match the default (3,) mean/std buffers).
    N, C, H, W = 2, 3, 16, 16
    x = jax.random.uniform(k_x, (N, C, H, W), dtype=jnp.float32)

    # Policy parameters: one weight vector of size NUM_OPS per (sub_policy, stage),
    # initialized U(0,1) as in nn.init.uniform_(p, 0, 1).
    params = jax.random.uniform(
        k_w, (NUM_SUB_POLICIES, OPERATION_COUNT, NUM_OPS), dtype=jnp.float32
    )

    # faster_auto_augment_policy defaults: mean = std = 0.5 * ones(3)
    mean = jnp.ones((C,), jnp.float32) * 0.5
    std = jnp.ones((C,), jnp.float32) * 0.5

    # Policy._forward: random.randrange(num_sub_policies), seeded for determinism.
    # NOTE: chosen host-side at trace time; under jit this bakes in one
    # sub-policy per compilation rather than re-sampling per call.
    idx = random.Random(0).randrange(NUM_SUB_POLICIES)

    out = policy_forward(params, x, mean, std, idx)
    jax.block_until_ready(out)
    assert out.shape == (N, C, H, W) and out.dtype == x.dtype
    print("KERNEL_OK")
</pallas_src>

<mosaic_0001>
module attributes {stable_mosaic.version = 11 : i64} {
  func.func @policy_kernel(%arg0: i32, %arg1: i32, %arg2: memref<2x7xf32, #tpu.memory_space<smem>>, %arg3: memref<6x256xf32, #tpu.memory_space<vmem>>, %arg4: memref<6x2xf32, #tpu.memory_space<vmem>>, %arg5: memref<6x256xf32, #tpu.memory_space<vmem>>) attributes {dimension_semantics = [#tpu.dimension_semantics<parallel>, #tpu.dimension_semantics<parallel>], iteration_bounds = array<i64: 1, 1>, scalar_prefetch = 0 : i64, scratch_operands = 0 : i64, tpu.core_type = #tpu.core_type<tc>, window_params = [{transform_indices = @transform_0, window_bounds = array<i64: 2, 7>}, {transform_indices = @transform_1, window_bounds = array<i64: 6, 256>}, {transform_indices = @transform_2, window_bounds = array<i64: 6, 2>}, {transform_indices = @transform_3, window_bounds = array<i64: 6, 256>}]} {
    %c0 = arith.constant 0 : index
    %c0_0 = arith.constant 0 : index
    %0 = vector.load %arg3[%c0, %c0_0] : memref<6x256xf32, #tpu.memory_space<vmem>>, vector<6x256xf32>
    %c0_1 = arith.constant 0 : index
    %c0_2 = arith.constant 0 : index
    %1 = memref.load %arg2[%c0_1, %c0_2] : memref<2x7xf32, #tpu.memory_space<smem>>
    %c0_3 = arith.constant 0 : index
    %c1 = arith.constant 1 : index
    %2 = memref.load %arg2[%c0_3, %c1] : memref<2x7xf32, #tpu.memory_space<smem>>
    %c0_4 = arith.constant 0 : index
    %c2 = arith.constant 2 : index
    %3 = memref.load %arg2[%c0_4, %c2] : memref<2x7xf32, #tpu.memory_space<smem>>
    %c0_5 = arith.constant 0 : index
    %c3 = arith.constant 3 : index
    %4 = memref.load %arg2[%c0_5, %c3] : memref<2x7xf32, #tpu.memory_space<smem>>
    %c0_6 = arith.constant 0 : index
    %c4 = arith.constant 4 : index
    %5 = memref.load %arg2[%c0_6, %c4] : memref<2x7xf32, #tpu.memory_space<smem>>
    %c0_7 = arith.constant 0 : index
    %c5 = arith.constant 5 : index
    %6 = memref.load %arg2[%c0_7, %c5] : memref<2x7xf32, #tpu.memory_space<smem>>
    %c0_8 = arith.constant 0 : index
    %c6 = arith.constant 6 : index
    %7 = memref.load %arg2[%c0_8, %c6] : memref<2x7xf32, #tpu.memory_space<smem>>
    %8 = vector.broadcast %1 : f32 to vector<6x256xf32>
    %9 = arith.mulf %8, %0 : vector<6x256xf32>
    %10 = vector.broadcast %2 : f32 to vector<6x256xf32>
    %11 = arith.addf %9, %10 : vector<6x256xf32>
    %cst = arith.constant 1.000000e+00 : f32
    %12 = vector.broadcast %cst : f32 to vector<6x256xf32>
    %13 = arith.subf %12, %0 : vector<6x256xf32>
    %14 = arith.minimumf %0, %13 : vector<6x256xf32>
    %15 = vector.broadcast %3 : f32 to vector<6x256xf32>
    %16 = arith.mulf %15, %14 : vector<6x256xf32>
    %17 = arith.addf %11, %16 : vector<6x256xf32>
    %cst_9 = arith.constant 4.000000e+00 : f32
    %18 = vector.broadcast %cst_9 : f32 to vector<6x256xf32>
    %19 = arith.mulf %0, %18 : vector<6x256xf32>
    %20 = math.floor %19 : vector<6x256xf32>
    %21 = vector.broadcast %4 : f32 to vector<6x256xf32>
    %22 = arith.mulf %21, %20 : vector<6x256xf32>
    %23 = arith.addf %17, %22 : vector<6x256xf32>
    %cst_10 = arith.constant 1.500000e+00 : f32
    %24 = vector.broadcast %cst_10 : f32 to vector<6x256xf32>
    %25 = arith.mulf %0, %24 : vector<6x256xf32>
    %cst_11 = arith.constant 2.500000e-01 : f32
    %26 = vector.broadcast %cst_11 : f32 to vector<6x256xf32>
    %27 = arith.subf %25, %26 : vector<6x256xf32>
    %cst_12 = arith.constant 0.000000e+00 : f32
    %cst_13 = arith.constant 1.000000e+00 : f32
    %28 = vector.broadcast %cst_12 : f32 to vector<6x256xf32>
    %29 = arith.maximumf %28, %27 : vector<6x256xf32>
    %30 = vector.broadcast %cst_13 : f32 to vector<6x256xf32>
    %31 = arith.minimumf %30, %29 : vector<6x256xf32>
    %32 = vector.broadcast %5 : f32 to vector<6x256xf32>
    %33 = arith.mulf %32, %31 : vector<6x256xf32>
    %34 = arith.addf %23, %33 : vector<6x256xf32>
    %cst_14 = arith.constant 1.300000e+00 : f32
    %35 = vector.broadcast %cst_14 : f32 to vector<6x256xf32>
    %36 = arith.mulf %0, %35 : vector<6x256xf32>
    %cst_15 = arith.constant 1.500000e-01 : f32
    %37 = vector.broadcast %cst_15 : f32 to vector<6x256xf32>
    %38 = arith.subf %36, %37 : vector<6x256xf32>
    %cst_16 = arith.constant 0.000000e+00 : f32
    %cst_17 = arith.constant 1.000000e+00 : f32
    %39 = vector.broadcast %cst_16 : f32 to vector<6x256xf32>
    %40 = arith.maximumf %39, %38 : vector<6x256xf32>
    %41 = vector.broadcast %cst_17 : f32 to vector<6x256xf32>
    %42 = arith.minimumf %41, %40 : vector<6x256xf32>
    %43 = vector.broadcast %6 : f32 to vector<6x256xf32>
    %44 = arith.mulf %43, %42 : vector<6x256xf32>
    %45 = arith.addf %34, %44 : vector<6x256xf32>
    %cst_18 = arith.constant 1.200000e+00 : f32
    %46 = vector.broadcast %cst_18 : f32 to vector<6x256xf32>
    %47 = arith.mulf %0, %46 : vector<6x256xf32>
    %cst_19 = arith.constant 1.000000e+00 : f32
    %48 = vector.broadcast %cst_19 : f32 to vector<6x256xf32>
    %49 = arith.minimumf %47, %48 : vector<6x256xf32>
    %50 = vector.broadcast %7 : f32 to vector<6x256xf32>
    %51 = arith.mulf %50, %49 : vector<6x256xf32>
    %52 = arith.addf %45, %51 : vector<6x256xf32>
    %c1_20 = arith.constant 1 : index
    %c0_21 = arith.constant 0 : index
    %53 = memref.load %arg2[%c1_20, %c0_21] : memref<2x7xf32, #tpu.memory_space<smem>>
    %c1_22 = arith.constant 1 : index
    %c1_23 = arith.constant 1 : index
    %54 = memref.load %arg2[%c1_22, %c1_23] : memref<2x7xf32, #tpu.memory_space<smem>>
    %c1_24 = arith.constant 1 : index
    %c2_25 = arith.constant 2 : index
    %55 = memref.load %arg2[%c1_24, %c2_25] : memref<2x7xf32, #tpu.memory_space<smem>>
    %c1_26 = arith.constant 1 : index
    %c3_27 = arith.constant 3 : index
    %56 = memref.load %arg2[%c1_26, %c3_27] : memref<2x7xf32, #tpu.memory_space<smem>>
    %c1_28 = arith.constant 1 : index
    %c4_29 = arith.constant 4 : index
    %57 = memref.load %arg2[%c1_28, %c4_29] : memref<2x7xf32, #tpu.memory_space<smem>>
    %c1_30 = arith.constant 1 : index
    %c5_31 = arith.constant 5 : index
    %58 = memref.load %arg2[%c1_30, %c5_31] : memref<2x7xf32, #tpu.memory_space<smem>>
    %c1_32 = arith.constant 1 : index
    %c6_33 = arith.constant 6 : index
    %59 = memref.load %arg2[%c1_32, %c6_33] : memref<2x7xf32, #tpu.memory_space<smem>>
    %60 = vector.broadcast %53 : f32 to vector<6x256xf32>
    %61 = arith.mulf %60, %52 : vector<6x256xf32>
    %62 = vector.broadcast %54 : f32 to vector<6x256xf32>
    %63 = arith.addf %61, %62 : vector<6x256xf32>
    %cst_34 = arith.constant 1.000000e+00 : f32
    %64 = vector.broadcast %cst_34 : f32 to vector<6x256xf32>
    %65 = arith.subf %64, %52 : vector<6x256xf32>
    %66 = arith.minimumf %52, %65 : vector<6x256xf32>
    %67 = vector.broadcast %55 : f32 to vector<6x256xf32>
    %68 = arith.mulf %67, %66 : vector<6x256xf32>
    %69 = arith.addf %63, %68 : vector<6x256xf32>
    %cst_35 = arith.constant 4.000000e+00 : f32
    %70 = vector.broadcast %cst_35 : f32 to vector<6x256xf32>
    %71 = arith.mulf %52, %70 : vector<6x256xf32>
    %72 = math.floor %71 : vector<6x256xf32>
    %73 = vector.broadcast %56 : f32 to vector<6x256xf32>
    %74 = arith.mulf %73, %72 : vector<6x256xf32>
    %75 = arith.addf %69, %74 : vector<6x256xf32>
    %cst_36 = arith.constant 1.500000e+00 : f32
    %76 = vector.broadcast %cst_36 : f32 to vector<6x256xf32>
    %77 = arith.mulf %52, %76 : vector<6x256xf32>
    %cst_37 = arith.constant 2.500000e-01 : f32
    %78 = vector.broadcast %cst_37 : f32 to vector<6x256xf32>
    %79 = arith.subf %77, %78 : vector<6x256xf32>
    %cst_38 = arith.constant 0.000000e+00 : f32
    %cst_39 = arith.constant 1.000000e+00 : f32
    %80 = vector.broadcast %cst_38 : f32 to vector<6x256xf32>
    %81 = arith.maximumf %80, %79 : vector<6x256xf32>
    %82 = vector.broadcast %cst_39 : f32 to vector<6x256xf32>
    %83 = arith.minimumf %82, %81 : vector<6x256xf32>
    %84 = vector.broadcast %57 : f32 to vector<6x256xf32>
    %85 = arith.mulf %84, %83 : vector<6x256xf32>
    %86 = arith.addf %75, %85 : vector<6x256xf32>
    %cst_40 = arith.constant 1.300000e+00 : f32
    %87 = vector.broadcast %cst_40 : f32 to vector<6x256xf32>
    %88 = arith.mulf %52, %87 : vector<6x256xf32>
    %cst_41 = arith.constant 1.500000e-01 : f32
    %89 = vector.broadcast %cst_41 : f32 to vector<6x256xf32>
    %90 = arith.subf %88, %89 : vector<6x256xf32>
    %cst_42 = arith.constant 0.000000e+00 : f32
    %cst_43 = arith.constant 1.000000e+00 : f32
    %91 = vector.broadcast %cst_42 : f32 to vector<6x256xf32>
    %92 = arith.maximumf %91, %90 : vector<6x256xf32>
    %93 = vector.broadcast %cst_43 : f32 to vector<6x256xf32>
    %94 = arith.minimumf %93, %92 : vector<6x256xf32>
    %95 = vector.broadcast %58 : f32 to vector<6x256xf32>
    %96 = arith.mulf %95, %94 : vector<6x256xf32>
    %97 = arith.addf %86, %96 : vector<6x256xf32>
    %cst_44 = arith.constant 1.200000e+00 : f32
    %98 = vector.broadcast %cst_44 : f32 to vector<6x256xf32>
    %99 = arith.mulf %52, %98 : vector<6x256xf32>
    %cst_45 = arith.constant 1.000000e+00 : f32
    %100 = vector.broadcast %cst_45 : f32 to vector<6x256xf32>
    %101 = arith.minimumf %99, %100 : vector<6x256xf32>
    %102 = vector.broadcast %59 : f32 to vector<6x256xf32>
    %103 = arith.mulf %102, %101 : vector<6x256xf32>
    %104 = arith.addf %97, %103 : vector<6x256xf32>
    %c0_46 = arith.constant 0 : index
    %c0_47 = arith.constant 0 : index
    %105 = vector.load %arg4[%c0_46, %c0_47] : memref<6x2xf32, #tpu.memory_space<vmem>>, vector<6x2xf32>
    %106 = vector.extract_strided_slice %105 {offsets = [0, 0], sizes = [6, 1], strides = [1, 1]} : vector<6x2xf32> to vector<6x1xf32>
    %107 = vector.extract_strided_slice %105 {offsets = [0, 1], sizes = [6, 1], strides = [1, 1]} : vector<6x2xf32> to vector<6x1xf32>
    %108 = vector.broadcast %106 : vector<6x1xf32> to vector<6x256xf32>
    %109 = arith.mulf %104, %108 : vector<6x256xf32>
    %110 = vector.broadcast %107 : vector<6x1xf32> to vector<6x256xf32>
    %111 = arith.addf %109, %110 : vector<6x256xf32>
    %c0_48 = arith.constant 0 : index
    %c0_49 = arith.constant 0 : index
    %112 = vector.load %arg5[%c0_48, %c0_49] : memref<6x256xf32, #tpu.memory_space<vmem>>, vector<6x256xf32>
    tpu.vector_store %arg5[%c0_48, %c0_49], %111 {strides = array<i32>} : memref<6x256xf32, #tpu.memory_space<vmem>>, vector<6x256xf32>,
    return
  }
  func.func @transform_0(%arg0: i32, %arg1: i32) -> (i32, i32) {
    %c0_i32 = arith.constant 0 : i32
    %c0_i32_0 = arith.constant 0 : i32
    %c0_i32_1 = arith.constant 0 : i32
    return %c0_i32, %c0_i32_0 : i32, i32
  }
  func.func @transform_1(%arg0: i32, %arg1: i32) -> (i32, i32) {
    %c0_i32 = arith.constant 0 : i32
    return %arg0, %arg1 : i32, i32
  }
  func.func @transform_2(%arg0: i32, %arg1: i32) -> (i32, i32) {
    %c0_i32 = arith.constant 0 : i32
    %c0_i32_0 = arith.constant 0 : i32
    return %arg0, %c0_i32 : i32, i32
  }
  func.func @transform_3(%arg0: i32, %arg1: i32) -> (i32, i32) {
    %c0_i32 = arith.constant 0 : i32
    return %arg0, %arg1 : i32, i32
  }
}

</mosaic_0001>

<llo_original>
// kernel: tpu_custom_call.1
$region0: #{tpu_custom_call.1}
  #allocation0 [shape = 'u32[]', space=smem, size = 0x4, offset = 0x4, fixed_abs, tag = 'smem constant byte address 0x4 - core index']
  #allocation1 [shape = 'u32[144,128]{1,0:T(1,128)}', space=vmem, size = 0x12000, scoped, tag = 'internal scratch']
  %s0 = inlined_call_operand.vmem [shape: f32[2,7], index: 0, kind: input, shape index: {}]
  %s1 = inlined_call_operand.hbm [shape: f32[6,256], index: 1, kind: input, shape index: {}]
  %s2 = inlined_call_operand.vmem [shape: f32[6,2], index: 2, kind: input, shape index: {}]
  %s3 = inlined_call_operand.hbm [shape: f32[6,256], index: 3, kind: output, shape index: {}]
  %s4 = sld [smem:[#allocation0]]
  $region30: #{tpu_custom_call.1} parent=0
    _
  %s6 = ssub.s32 1, %s4
  %s7 = scalar_select 0, %s6, %s4
  $region1: #{tpu_custom_call.1} parent=0
    #allocation2 [shape = 'u8[1024]{0}', space=smem, size = 0x400, scoped, tag = 'input window, operand 0, single buffered']
    #allocation3 [shape = 's32[1]{0}', space=sflag, size = 0x4, scoped, tag = 'scoped memory for tpu_custom_call.1']
    #allocation4 [shape = 's32[1]{0}', space=sflag, size = 0x4, scoped, tag = 'scoped memory for tpu_custom_call.1']
    #allocation5 [shape = 's32[1]{0}', space=sflag, size = 0x4, scoped, tag = 'scoped memory for tpu_custom_call.1']
    #allocation6 [shape = 'u8[8192]{0}', space=vmem, size = 0x2000, scoped, tag = 'input window, operand 1, single buffered']
    #allocation7 [shape = 'u8[8192]{0}', space=vmem, size = 0x2000, scoped, tag = 'output window, operand 0, single buffered']
    %8 = vsyncpa [#allocation5], 0
    %9 = vsyncpa [#allocation3], 0
    %10 = vsyncpa [#allocation4], 0
    // Predicated region
    $region2: #{tpu_custom_call.1} parent=1 // pred_check
      _
    $region3: #{tpu_custom_call.1} parent=1 // pred_check_branch
      %12 = sbr.rel (0) target = $region5
    $region4: #{tpu_custom_call.1} parent=1 // pred_region
      %s14 = ssub.s32 32, 32
      %15 = vsyncadd [#allocation5], %s14
      %s17 = sshll.u32 %s0, 4
      %s18 = int_to_ptr.vmem [resolvable:$true] %s17
      %20 = dma.vmem_to_smem %s18, 32, [#allocation2], [#allocation5]
    $region5: #{tpu_custom_call.1} parent=1 // pred_fallthru
      _
    // Predicated region
    $region6: #{tpu_custom_call.1} parent=1 // pred_check
      _
    $region7: #{tpu_custom_call.1} parent=1 // pred_check_branch
      %22 = sbr.rel (0) target = $region9
    $region8: #{tpu_custom_call.1} parent=1 // pred_region
      %s24 = ssub.s32 256, 256
      %25 = vsyncadd [#allocation3], %s24
      %s27 = sshll.u32 [#allocation6], 4
      %s28 = int_to_ptr.vmem [resolvable:$true] %s27
      %30 = dma.hbm_to_vmem [thread:$0]  %s1, 256, %s28, [#allocation3]
    $region9: #{tpu_custom_call.1} parent=1 // pred_fallthru
      _
    // Predicated region
    $region10: #{tpu_custom_call.1} parent=1 // pred_check
      _
    $region11: #{tpu_custom_call.1} parent=1 // pred_check_branch
      %32 = sbr.rel (0) target = $region13
    $region12: #{tpu_custom_call.1} parent=1 // pred_region
      _
    $region13: #{tpu_custom_call.1} parent=1 // pred_fallthru
      _
    // Predicated region
    $region14: #{tpu_custom_call.1} parent=1 // pred_check
      _
    $region15: #{tpu_custom_call.1} parent=1 // pred_check_branch
      %34 = sbr.rel (0) target = $region17
    $region16: #{tpu_custom_call.1} parent=1 // pred_region
      %35 = dma.done [#allocation5], 32
    $region17: #{tpu_custom_call.1} parent=1 // pred_fallthru
      _
    // Predicated region
    $region18: #{tpu_custom_call.1} parent=1 // pred_check
      _
    $region19: #{tpu_custom_call.1} parent=1 // pred_check_branch
      %37 = sbr.rel (0) target = $region21
    $region20: #{tpu_custom_call.1} parent=1 // pred_region
      %38 = dma.done [#allocation3], 256
    $region21: #{tpu_custom_call.1} parent=1 // pred_fallthru
      _
    %39 = sfence
    %v40 = vld [vmem:[#allocation6] sm:$0x3f]
    %v41 = vld [vmem:[#allocation6 + $0x8] sm:$0x3f]
    %s42 = sld [smem:[#allocation2]]
    %s43 = sld [smem:[#allocation2 + $0x1]]
    %s44 = sld [smem:[#allocation2 + $0x2]]
    %s45 = sld [smem:[#allocation2 + $0x3]]
    %s46 = sld [smem:[#allocation2 + $0x4]]
    %s47 = sld [smem:[#allocation2 + $0x5]]
    %s48 = sld [smem:[#allocation2 + $0x6]]
    %v49 = vstv %s42
    %v50 = vmul.f32 %v49, %v40
    %v51 = vmul.f32 %v49, %v41
    %v52 = vstv %s43
    %v53 = vadd.f32 %v50, %v52
    %v54 = vadd.f32 %v51, %v52
    %v55 = vsub.f32 1.0, %v40
    %v56 = vsub.f32 1.0, %v41
    %v57 = vmin.f32 %v40, %v55
    %v58 = vmin.f32 %v41, %v56
    %v59 = vstv %s44
    %v60 = vmul.f32 %v59, %v57
    %v61 = vmul.f32 %v59, %v58
    %v62 = vadd.f32 %v53, %v60
    %v63 = vadd.f32 %v54, %v61
    %v64 = vmul.f32 %v40, 4.0
    %v65 = vmul.f32 %v41, 4.0
    %v66 = vfloor.f32 %v64
    %v67 = vfloor.f32 %v65
    %v68 = vstv %s45
    %v69 = vmul.f32 %v68, %v66
    %v70 = vmul.f32 %v68, %v67
    %v71 = vadd.f32 %v62, %v69
    %v72 = vadd.f32 %v63, %v70
    %v73 = vmul.f32 %v40, 1.5
    %v74 = vmul.f32 %v41, 1.5
    %v75 = vsub.f32 %v73, 0.25
    %v76 = vsub.f32 %v74, 0.25
    %v77 = vmax.f32 %v75, 0.0
    %v78 = vmax.f32 %v76, 0.0
    %v79 = vmin.f32 %v77, 1.0
    %v80 = vmin.f32 %v78, 1.0
    %v81 = vstv %s46
    %v82 = vmul.f32 %v81, %v79
    %v83 = vmul.f32 %v81, %v80
    %v84 = vadd.f32 %v71, %v82
    %v85 = vadd.f32 %v72, %v83
    %v86 = vmul.f32 %v40, 1.3
    %v87 = vmul.f32 %v41, 1.3
    %v88 = vsub.f32 %v86, 0.15
    %v89 = vsub.f32 %v87, 0.15
    %v90 = vmax.f32 %v88, 0.0
    %v91 = vmax.f32 %v89, 0.0
    %v92 = vmin.f32 %v90, 1.0
    %v93 = vmin.f32 %v91, 1.0
    %v94 = vstv %s47
    %v95 = vmul.f32 %v94, %v92
    %v96 = vmul.f32 %v94, %v93
    %v97 = vadd.f32 %v84, %v95
    %v98 = vadd.f32 %v85, %v96
    %v99 = vmul.f32 %v40, 1.2
    %v100 = vmul.f32 %v41, 1.2
    %v101 = vmin.f32 %v99, 1.0
    %v102 = vmin.f32 %v100, 1.0
    %v103 = vstv %s48
    %v104 = vmul.f32 %v103, %v101
    %v105 = vmul.f32 %v103, %v102
    %v106 = vadd.f32 %v97, %v104
    %v107 = vadd.f32 %v98, %v105
    %s108 = sld [smem:[#allocation2 + $0x80]]
    %s109 = sld [smem:[#allocation2 + $0x81]]
    %s110 = sld [smem:[#allocation2 + $0x82]]
    %s111 = sld [smem:[#allocation2 + $0x83]]
    %s112 = sld [smem:[#allocation2 + $0x84]]
    %s113 = sld [smem:[#allocation2 + $0x85]]
    %s114 = sld [smem:[#allocation2 + $0x86]]
    %v115 = vstv %s108
    %v116 = vmul.f32 %v115, %v106
    %v117 = vmul.f32 %v115, %v107
    %v118 = vstv %s109
    %v119 = vadd.f32 %v116, %v118
    %v120 = vadd.f32 %v117, %v118
    %v121 = vsub.f32 1.0, %v106
    %v122 = vsub.f32 1.0, %v107
    %v123 = vmin.f32 %v106, %v121
    %v124 = vmin.f32 %v107, %v122
    %v125 = vstv %s110
    %v126 = vmul.f32 %v125, %v123
    %v127 = vmul.f32 %v125, %v124
    %v128 = vadd.f32 %v119, %v126
    %v129 = vadd.f32 %v120, %v127
    %v130 = vmul.f32 %v106, 4.0
    %v131 = vmul.f32 %v107, 4.0
    %v132 = vfloor.f32 %v130
    %v133 = vfloor.f32 %v131
    %v134 = vstv %s111
    %v135 = vmul.f32 %v134, %v132
    %v136 = vmul.f32 %v134, %v133
    %v137 = vadd.f32 %v128, %v135
    %v138 = vadd.f32 %v129, %v136
    %v139 = vmul.f32 %v106, 1.5
    %v140 = vmul.f32 %v107, 1.5
    %v141 = vsub.f32 %v139, 0.25
    %v142 = vsub.f32 %v140, 0.25
    %v143 = vmax.f32 %v141, 0.0
    %v144 = vmax.f32 %v142, 0.0
    %v145 = vmin.f32 %v143, 1.0
    %v146 = vmin.f32 %v144, 1.0
    %v147 = vstv %s112
    %v148 = vmul.f32 %v147, %v145
    %v149 = vmul.f32 %v147, %v146
    %v150 = vadd.f32 %v137, %v148
    %v151 = vadd.f32 %v138, %v149
    %v152 = vmul.f32 %v106, 1.3
    %v153 = vmul.f32 %v107, 1.3
    %v154 = vsub.f32 %v152, 0.15
    %v155 = vsub.f32 %v153, 0.15
    %v156 = vmax.f32 %v154, 0.0
    %v157 = vmax.f32 %v155, 0.0
    %v158 = vmin.f32 %v156, 1.0
    %v159 = vmin.f32 %v157, 1.0
    %v160 = vstv %s113
    %v161 = vmul.f32 %v160, %v158
    %v162 = vmul.f32 %v160, %v159
    %v163 = vadd.f32 %v150, %v161
    %v164 = vadd.f32 %v151, %v162
    %v165 = vmul.f32 %v106, 1.2
    %v166 = vmul.f32 %v107, 1.2
    %v167 = vmin.f32 %v165, 1.0
    %v168 = vmin.f32 %v166, 1.0
    %v169 = vstv %s114
    %v170 = vmul.f32 %v169, %v167
    %v171 = vmul.f32 %v169, %v168
    %v172 = vadd.f32 %v163, %v170
    %v173 = vadd.f32 %v164, %v171
    %v174 = vld [vmem:[%s2] sm:$0x3f]
    %176 = vset.pattern.permute.xlu0 0
    %177 = vperm.xlu0 %176, %v174
    %v178 = vpop.permute.xlu0 %177
    %v180 = vmul.f32 %v172, %v178
    %v181 = vmul.f32 %v173, %v178
    %182 = vset.pattern.permute.xlu0 1
    %183 = vperm.xlu0 %182, %v174
    %v184 = vpop.permute.xlu0 %183
    %v186 = vadd.f32 %v180, %v184
    %v187 = vadd.f32 %v181, %v184
    %188 = vst [vmem:[#allocation7] sm:$0x3f] %v186
    %189 = vst [vmem:[#allocation7 + $0x8] sm:$0x3f] %v187
    // Predicated region
    $region22: #{tpu_custom_call.1} parent=1 // pred_check
      _
    $region23: #{tpu_custom_call.1} parent=1 // pred_check_branch
      %191 = sbr.rel (0) target = $region25
    $region24: #{tpu_custom_call.1} parent=1 // pred_region
      %s193 = ssub.s32 256, 256
      %194 = vsyncadd [#allocation4], %s193
      %s196 = sshll.u32 [#allocation7], 4
      %s197 = int_to_ptr.vmem [resolvable:$true] %s196
      %199 = dma.vmem_to_hbm [thread:$0]  %s197, 256, %s3, [#allocation4]
    $region25: #{tpu_custom_call.1} parent=1 // pred_fallthru
      _
    // Predicated region
    $region26: #{tpu_custom_call.1} parent=1 // pred_check
      _
    $region27: #{tpu_custom_call.1} parent=1 // pred_check_branch
      %201 = sbr.rel (0) target = $region29
    $region28: #{tpu_custom_call.1} parent=1 // pred_region
      %202 = dma.done [#allocation4], 256
    $region29: #{tpu_custom_call.1} parent=1 // pred_fallthru
      _
    %203 = vsyncpa [#allocation3], 1
    %204 = vsyncpa [#allocation4], 1
    %205 = vsyncpa [#allocation5], 1

</llo_original>
